<compile_context>
chip_gen: v6e
topology: v6e:2x2x1
jax: 0.10.0
libtpu: 0.0.40
codegen_flags: <defaults>
</compile_context>

<pallas_src>
import functools

import jax
import jax.numpy as jnp
from jax import lax
from jax.experimental import pallas as pl
from jax.experimental.pallas import tpu as pltpu


def _resize_matrix_1d(out_size: int, in_size: int) -> jnp.ndarray:
    """1-D bilinear resize matrix R (out_size, in_size), align_corners=True."""
    if in_size == 1:
        return jnp.ones((out_size, 1), jnp.float32)
    if out_size == 1:
        src = jnp.zeros((1,), jnp.float32)
    else:
        src = jnp.arange(out_size, dtype=jnp.float32) * (in_size - 1) / (out_size - 1)
    lo = jnp.floor(src)
    w_hi = src - lo
    lo_i = lo.astype(jnp.int32)
    hi_i = jnp.minimum(lo_i + 1, in_size - 1)
    cols = jnp.arange(in_size, dtype=jnp.int32)
    r = ((cols[None, :] == lo_i[:, None]).astype(jnp.float32) * (1.0 - w_hi)[:, None]
         + (cols[None, :] == hi_i[:, None]).astype(jnp.float32) * w_hi[:, None])
    return r.astype(jnp.float32)


def _choose_tile_p(p: int, max_tile: int = 2048) -> int:
    """Largest output-pixel tile that is a multiple of 128, divides p, <= max_tile."""
    if p <= max_tile or p % 128 != 0:
        return p
    t = max_tile - (max_tile % 128)
    while t >= 128:
        if p % t == 0:
            return t
        t -= 128
    return p


def _spatial_uv_kernel(uv_ref, rT_ref, img_ref, out_ref, *, c, h, w):
    """One (batch, pixel-tile) block of the fused resize + grid_sample."""
    tile_p = rT_ref.shape[1]

    # ---- bilinear resize (uh,uw) -> tile of (H,W): one (2, uv_n)x(uv_n, tile_P) matmul
    g = jnp.dot(uv_ref[0], rT_ref[...], preferred_element_type=jnp.float32)   # (2, tile_P)

    # grid coords in (-1,1) -> pixel coords (align_corners=True)
    ix = (g[0:1, :] + 1.0) * (0.5 * (w - 1))                                  # (1, tile_P)
    iy = (g[1:2, :] + 1.0) * (0.5 * (h - 1))                                  # (1, tile_P)

    x0f = jnp.floor(ix)
    y0f = jnp.floor(iy)
    wx1 = ix - x0f
    wx0 = 1.0 - wx1
    wy1 = iy - y0f
    wy0 = 1.0 - wy1
    x0 = x0f.astype(jnp.int32)                                                # (1, tile_P)
    y0 = y0f.astype(jnp.int32)

    # Integer pixel indices (exact compares, plain VALU ops).
    qx = lax.broadcasted_iota(jnp.int32, (w, tile_p), 0)                      # (W, tile_P)
    qy = lax.broadcasted_iota(jnp.int32, (h, tile_p), 0)                      # (H, tile_P)

    # Separable bilinear "one-hot" weights.  Out-of-range corners match no
    # index, reproducing grid_sample padding_mode='zeros'.
    sx = (jnp.where(qx == x0, wx0, 0.0)
          + jnp.where(qx == x0 + 1, wx1, 0.0))                                # (W, tile_P) f32
    sy = (jnp.where(qy == y0, wy0, 0.0)
          + jnp.where(qy == y0 + 1, wy1, 0.0))                                # (H, tile_P) f32

    # ---- x-gather on the MXU (bf16 operands, f32 accumulation) --------------
    tmp = jnp.dot(img_ref[0], sx.astype(jnp.bfloat16),
                  preferred_element_type=jnp.float32)                         # (C*H, tile_P)

    # ---- y-gather: weighted sublane reduction (VPU multiply + XLU reduce) ---
    out = jnp.sum(tmp.reshape(c, h, tile_p) * sy[None, :, :], axis=1)         # (C, tile_P)
    out_ref[0] = out.astype(out_ref.dtype)


@functools.partial(jax.jit, static_argnums=(4,))
def spatial_uv_transformer(inp, tensor_3d, weight, bias, uv_resolution_shape):
    B, din = inp.shape
    _, C, H, W = tensor_3d.shape
    uh, uw = uv_resolution_shape
    uv_n = uh * uw
    P = H * W
    assert weight.shape == (2 * uv_n, din)

    # infer_uv head hoisted to XLA: M=1 matmuls would waste the MXU in-kernel.
    logits = jnp.dot(inp.astype(jnp.float32), weight.T.astype(jnp.float32)) + bias.astype(jnp.float32)
    uv = (jax.nn.sigmoid(logits) * 2.0 - 1.0).reshape(B, 2, uv_n)             # (B, 2, uv_n), in (-1,1)

    # Constant bilinear-resize operator (uh*uw -> H*W), transposed.  Constant-folds under jit.
    rh = _resize_matrix_1d(H, uh)                                             # (H, uh)
    rw = _resize_matrix_1d(W, uw)                                             # (W, uw)
    rT = jnp.kron(rh, rw).T                                                   # (uv_n, P)

    # Image in bf16, spatial rows flattened into the sublane axis: (B, C*H, W).
    img = tensor_3d.reshape(B, C * H, W).astype(jnp.bfloat16)

    tile_p = _choose_tile_p(P)
    n_p = P // tile_p

    kernel = functools.partial(_spatial_uv_kernel, c=C, h=H, w=W)

    # Rough per-step VMEM residency (double-buffered IO + in-kernel temporaries).
    est_vmem = (2 * (2 * uv_n * 4 + uv_n * tile_p * 4 + C * H * W * 2 + C * tile_p * 4)
                + (H + W) * tile_p * 4          # sx, sy
                + C * H * tile_p * 4            # tmp
                + 8 * tile_p * 4)               # g / ix / iy / corner weights
    compiler_kwargs = dict(dimension_semantics=("parallel", "parallel"))
    if est_vmem > 12 * 1024 * 1024:
        # Sized for v7x's 64 MiB VMEM (v5e/v6e have 128 MiB, so this is safe everywhere).
        compiler_kwargs["vmem_limit_bytes"] = min(int(est_vmem * 3 // 2), 48 * 1024 * 1024)

    cost = pl.CostEstimate(
        flops=2 * B * P * (2 * uv_n + C * H * W),
        transcendentals=0,
        bytes_accessed=int(B * 2 * uv_n * 4 + B * uv_n * P * 4 + B * C * H * W * 2 + B * C * P * 4),
    )

    out = pl.pallas_call(
        kernel,
        out_shape=jax.ShapeDtypeStruct((B, C, P), jnp.float32),
        grid_spec=pltpu.PrefetchScalarGridSpec(
            num_scalar_prefetch=0,
            grid=(B, n_p),
            in_specs=[
                pl.BlockSpec((1, 2, uv_n), lambda b, p: (b, 0, 0)),           # uv (tiny, revisited over p)
                pl.BlockSpec((uv_n, tile_p), lambda b, p: (0, p)),            # resize matrix, tiled along P
                pl.BlockSpec((1, C * H, W), lambda b, p: (b, 0, 0)),          # full image (revisited over p)
            ],
            out_specs=pl.BlockSpec((1, C, tile_p), lambda b, p: (b, 0, p)),   # lane-dense (C, tile_P)
        ),
        compiler_params=pltpu.CompilerParams(**compiler_kwargs),
        cost_estimate=cost,
    )(uv, rT, img)

    return out.reshape(B, C, H, W)


# ----------------------------- pure-JAX reference -----------------------------
def _reference(inp, tensor_3d, weight, bias, uv_resolution_shape):
    B, _ = inp.shape
    _, C, H, W = tensor_3d.shape
    uh, uw = uv_resolution_shape
    logits = inp @ weight.T + bias
    uv = (jax.nn.sigmoid(logits) * 2.0 - 1.0).reshape(B, 2, uh, uw)
    rh = _resize_matrix_1d(H, uh)
    rw = _resize_matrix_1d(W, uw)
    uv_big = jnp.einsum('hi,wj,bcij->bchw', rh, rw, uv)                       # (B, 2, H, W)
    ix = (uv_big[:, 0] + 1.0) * 0.5 * (W - 1)                                 # (B, H, W)
    iy = (uv_big[:, 1] + 1.0) * 0.5 * (H - 1)

    def sample_one(img_b, ixb, iyb):
        x0 = jnp.floor(ixb)
        y0 = jnp.floor(iyb)
        wx1 = ixb - x0
        wy1 = iyb - y0
        flat_img = img_b.reshape(C, H * W)

        def corner(xc, yc, wgt):
            xi = xc.astype(jnp.int32)
            yi = yc.astype(jnp.int32)
            inb = ((xi >= 0) & (xi < W) & (yi >= 0) & (yi < H)).astype(jnp.float32)
            xi_c = jnp.clip(xi, 0, W - 1)
            yi_c = jnp.clip(yi, 0, H - 1)
            vals = flat_img[:, yi_c * W + xi_c]                               # (C, H, W)
            return vals * (wgt * inb)[None]

        return (corner(x0, y0, (1 - wx1) * (1 - wy1))
                + corner(x0 + 1, y0, wx1 * (1 - wy1))
                + corner(x0, y0 + 1, (1 - wx1) * wy1)
                + corner(x0 + 1, y0 + 1, wx1 * wy1))

    return jax.vmap(sample_one)(tensor_3d, ix, iy)


if __name__ == "__main__":
    key = jax.random.PRNGKey(0)
    k1, k2, k3, k4 = jax.random.split(key, 4)

    B, C, H, W = 2, 4, 16, 16       # tensor_3d: NCHW
    DIN = 32                        # feature size i
    UV_RES = (8, 8)                 # uv_resolution_shape
    uv_n = UV_RES[0] * UV_RES[1]

    inp = jax.random.normal(k1, (B, DIN), dtype=jnp.float32)
    tensor_3d = jax.random.normal(k2, (B, C, H, W), dtype=jnp.float32)
    # Deterministic synthetic Linear(i, 2*prod(uv_res)) parameters.
    weight = jax.random.normal(k3, (2 * uv_n, DIN), dtype=jnp.float32) * 0.1
    bias = jax.random.normal(k4, (2 * uv_n,), dtype=jnp.float32) * 0.1

    out = spatial_uv_transformer(inp, tensor_3d, weight, bias, UV_RES)
    out = jax.block_until_ready(out)
    assert out.shape == (B, C, H, W) and out.dtype == jnp.float32

    ref = _reference(inp, tensor_3d, weight, bias, UV_RES)
    err = float(jnp.max(jnp.abs(out - ref)))
    assert err < 0.1, f"max abs error vs reference: {err}"
    print("KERNEL_OK")
</pallas_src>

<mosaic_0001>
module attributes {stable_mosaic.version = 11 : i64} {
  func.func @_spatial_uv_kernel(%arg0: i32, %arg1: i32, %arg2: memref<1x2x64xf32, #tpu.memory_space<vmem>>, %arg3: memref<64x256xf32, #tpu.memory_space<vmem>>, %arg4: memref<1x64x16xbf16, #tpu.memory_space<vmem>>, %arg5: memref<1x4x256xf32, #tpu.memory_space<vmem>>) attributes {dimension_semantics = [#tpu.dimension_semantics<parallel>, #tpu.dimension_semantics<parallel>], iteration_bounds = array<i64: 2, 1>, scalar_prefetch = 0 : i64, scratch_operands = 0 : i64, tpu.core_type = #tpu.core_type<tc>, window_params = [{transform_indices = @transform_0, window_bounds = array<i64: 1, 2, 64>}, {transform_indices = @transform_1, window_bounds = array<i64: 64, 256>}, {transform_indices = @transform_2, window_bounds = array<i64: 1, 64, 16>}, {transform_indices = @transform_3, window_bounds = array<i64: 1, 4, 256>}]} {
    %c0 = arith.constant 0 : index
    %c0_0 = arith.constant 0 : index
    %c0_1 = arith.constant 0 : index
    %0 = vector.load %arg2[%c0, %c0_0, %c0_1] : memref<1x2x64xf32, #tpu.memory_space<vmem>>, vector<1x2x64xf32>
    %1 = vector.shape_cast %0 : vector<1x2x64xf32> to vector<2x64xf32>
    %c0_2 = arith.constant 0 : index
    %c0_3 = arith.constant 0 : index
    %2 = vector.load %arg3[%c0_2, %c0_3] : memref<64x256xf32, #tpu.memory_space<vmem>>, vector<64x256xf32>
    %cst = arith.constant dense<0.000000e+00> : vector<2x256xf32>
    %3 = tpu.matmul %1, %2, %cst {dimension_numbers = #tpu.dot_dimension_numbers<[1], [0], [0], [1], [0, 0, 1, 1], [], []>} : vector<2x64xf32>, vector<64x256xf32>, vector<2x256xf32> -> vector<2x256xf32>
    %4 = vector.extract_strided_slice %3 {offsets = [0, 0], sizes = [1, 256], strides = [1, 1]} : vector<2x256xf32> to vector<1x256xf32>
    %cst_4 = arith.constant 1.000000e+00 : f32
    %5 = vector.broadcast %cst_4 : f32 to vector<1x256xf32>
    %6 = arith.addf %4, %5 : vector<1x256xf32>
    %cst_5 = arith.constant 7.500000e+00 : f32
    %7 = vector.broadcast %cst_5 : f32 to vector<1x256xf32>
    %8 = arith.mulf %6, %7 : vector<1x256xf32>
    %9 = vector.extract_strided_slice %3 {offsets = [1, 0], sizes = [1, 256], strides = [1, 1]} : vector<2x256xf32> to vector<1x256xf32>
    %cst_6 = arith.constant 1.000000e+00 : f32
    %10 = vector.broadcast %cst_6 : f32 to vector<1x256xf32>
    %11 = arith.addf %9, %10 : vector<1x256xf32>
    %cst_7 = arith.constant 7.500000e+00 : f32
    %12 = vector.broadcast %cst_7 : f32 to vector<1x256xf32>
    %13 = arith.mulf %11, %12 : vector<1x256xf32>
    %14 = math.floor %8 : vector<1x256xf32>
    %15 = math.floor %13 : vector<1x256xf32>
    %16 = arith.subf %8, %14 : vector<1x256xf32>
    %cst_8 = arith.constant 1.000000e+00 : f32
    %17 = vector.broadcast %cst_8 : f32 to vector<1x256xf32>
    %18 = arith.subf %17, %16 : vector<1x256xf32>
    %19 = arith.subf %13, %15 : vector<1x256xf32>
    %cst_9 = arith.constant 1.000000e+00 : f32
    %20 = vector.broadcast %cst_9 : f32 to vector<1x256xf32>
    %21 = arith.subf %20, %19 : vector<1x256xf32>
    %22 = arith.fptosi %14 : vector<1x256xf32> to vector<1x256xi32>
    %23 = arith.fptosi %15 : vector<1x256xf32> to vector<1x256xi32>
    %24 = tpu.iota {dimensions = array<i32: 0>} : vector<16x256xi32>
    %25 = tpu.iota {dimensions = array<i32: 0>} : vector<16x256xi32>
    %26 = vector.broadcast %22 : vector<1x256xi32> to vector<16x256xi32>
    %27 = arith.cmpi eq, %24, %26 : vector<16x256xi32>
    %cst_10 = arith.constant 0.000000e+00 : f32
    %28 = vector.shape_cast %18 : vector<1x256xf32> to vector<1x256xf32>
    %29 = vector.broadcast %28 : vector<1x256xf32> to vector<16x256xf32>
    %30 = vector.broadcast %cst_10 : f32 to vector<16x256xf32>
    %31 = arith.select %27, %29, %30 : vector<16x256xi1>, vector<16x256xf32>
    %c1_i32 = arith.constant 1 : i32
    %32 = vector.broadcast %c1_i32 : i32 to vector<1x256xi32>
    %33 = arith.addi %22, %32 : vector<1x256xi32>
    %34 = vector.broadcast %33 : vector<1x256xi32> to vector<16x256xi32>
    %35 = arith.cmpi eq, %24, %34 : vector<16x256xi32>
    %cst_11 = arith.constant 0.000000e+00 : f32
    %36 = vector.shape_cast %16 : vector<1x256xf32> to vector<1x256xf32>
    %37 = vector.broadcast %36 : vector<1x256xf32> to vector<16x256xf32>
    %38 = vector.broadcast %cst_11 : f32 to vector<16x256xf32>
    %39 = arith.select %35, %37, %38 : vector<16x256xi1>, vector<16x256xf32>
    %40 = arith.addf %31, %39 : vector<16x256xf32>
    %41 = vector.broadcast %23 : vector<1x256xi32> to vector<16x256xi32>
    %42 = arith.cmpi eq, %25, %41 : vector<16x256xi32>
    %cst_12 = arith.constant 0.000000e+00 : f32
    %43 = vector.shape_cast %21 : vector<1x256xf32> to vector<1x256xf32>
    %44 = vector.broadcast %43 : vector<1x256xf32> to vector<16x256xf32>
    %45 = vector.broadcast %cst_12 : f32 to vector<16x256xf32>
    %46 = arith.select %42, %44, %45 : vector<16x256xi1>, vector<16x256xf32>
    %c1_i32_13 = arith.constant 1 : i32
    %47 = vector.broadcast %c1_i32_13 : i32 to vector<1x256xi32>
    %48 = arith.addi %23, %47 : vector<1x256xi32>
    %49 = vector.broadcast %48 : vector<1x256xi32> to vector<16x256xi32>
    %50 = arith.cmpi eq, %25, %49 : vector<16x256xi32>
    %cst_14 = arith.constant 0.000000e+00 : f32
    %51 = vector.shape_cast %19 : vector<1x256xf32> to vector<1x256xf32>
    %52 = vector.broadcast %51 : vector<1x256xf32> to vector<16x256xf32>
    %53 = vector.broadcast %cst_14 : f32 to vector<16x256xf32>
    %54 = arith.select %50, %52, %53 : vector<16x256xi1>, vector<16x256xf32>
    %55 = arith.addf %46, %54 : vector<16x256xf32>
    %c0_15 = arith.constant 0 : index
    %c0_16 = arith.constant 0 : index
    %c0_17 = arith.constant 0 : index
    %56 = vector.load %arg4[%c0_15, %c0_16, %c0_17] : memref<1x64x16xbf16, #tpu.memory_space<vmem>>, vector<1x64x16xbf16>
    %57 = vector.shape_cast %56 : vector<1x64x16xbf16> to vector<64x16xbf16>
    %58 = arith.truncf %40 : vector<16x256xf32> to vector<16x256xbf16>
    %cst_18 = arith.constant dense<0.000000e+00> : vector<64x256xf32>
    %59 = tpu.matmul %57, %58, %cst_18 {dimension_numbers = #tpu.dot_dimension_numbers<[1], [0], [0], [1], [0, 0, 1, 1], [], []>} : vector<64x16xbf16>, vector<16x256xbf16>, vector<64x256xf32> -> vector<64x256xf32>
    %60 = vector.shape_cast %59 : vector<64x256xf32> to vector<4x16x256xf32>
    %61 = vector.shape_cast %55 : vector<16x256xf32> to vector<1x16x256xf32>
    %62 = vector.broadcast %61 : vector<1x16x256xf32> to vector<4x16x256xf32>
    %63 = arith.mulf %60, %62 : vector<4x16x256xf32>
    %cst_19 = arith.constant dense<0.000000e+00> : vector<4x256xf32>
    %64 = vector.multi_reduction <add>, %63, %cst_19 [1] : vector<4x16x256xf32> to vector<4x256xf32>
    %c0_20 = arith.constant 0 : index
    %c0_21 = arith.constant 0 : index
    %c0_22 = arith.constant 0 : index
    %65 = vector.load %arg5[%c0_20, %c0_21, %c0_22] : memref<1x4x256xf32, #tpu.memory_space<vmem>>, vector<1x4x256xf32>
    %66 = vector.shape_cast %65 : vector<1x4x256xf32> to vector<4x256xf32>
    %67 = vector.shape_cast %64 : vector<4x256xf32> to vector<1x4x256xf32>
    tpu.vector_store %arg5[%c0_20, %c0_21, %c0_22], %67 {strides = array<i32>} : memref<1x4x256xf32, #tpu.memory_space<vmem>>, vector<1x4x256xf32>,
    return
  }
  func.func @transform_0(%arg0: i32, %arg1: i32) -> (i32, i32, i32) {
    %c0_i32 = arith.constant 0 : i32
    %c0_i32_0 = arith.constant 0 : i32
    %c0_i32_1 = arith.constant 0 : i32
    return %arg0, %c0_i32, %c0_i32_0 : i32, i32, i32
  }
  func.func @transform_1(%arg0: i32, %arg1: i32) -> (i32, i32) {
    %c0_i32 = arith.constant 0 : i32
    %c0_i32_0 = arith.constant 0 : i32
    return %c0_i32, %arg1 : i32, i32
  }
  func.func @transform_2(%arg0: i32, %arg1: i32) -> (i32, i32, i32) {
    %c0_i32 = arith.constant 0 : i32
    %c0_i32_0 = arith.constant 0 : i32
    %c0_i32_1 = arith.constant 0 : i32
    return %arg0, %c0_i32, %c0_i32_0 : i32, i32, i32
  }
  func.func @transform_3(%arg0: i32, %arg1: i32) -> (i32, i32, i32) {
    %c0_i32 = arith.constant 0 : i32
    %c0_i32_0 = arith.constant 0 : i32
    return %arg0, %c0_i32, %arg1 : i32, i32, i32
  }
}

</mosaic_0001>

<llo_original>
// kernel: spatial_uv_transformer.1
$region0: #{spatial_uv_transformer.1}
  #allocation0 [shape = 'u32[]', space=smem, size = 0x4, offset = 0x4, fixed_abs, tag = 'smem constant byte address 0x4 - core index']
  #allocation1 [shape = 'u32[144,128]{1,0:T(1,128)}', space=vmem, size = 0x12000, scoped, tag = 'internal scratch']
  %s0 = inlined_call_operand.vmem [shape: f32[2,2,64], index: 0, kind: input, shape index: {}]
  %s1 = inlined_call_operand.vmem [shape: f32[64,256], index: 1, kind: input, shape index: {}]
  %s2 = inlined_call_operand.vmem [shape: bf16[2,64,16], index: 2, kind: input, shape index: {}]
  %s3 = inlined_call_operand.vmem [shape: f32[2,4,256], index: 3, kind: output, shape index: {}]
  %s4 = sld [smem:[#allocation0]]
  $region45: #{spatial_uv_transformer.1} parent=0
    _
  %s6 = ssub.s32 1, %s4
  %s7 = scalar_select 0, %s6, %s4
  loop: start=0, step=1, limit=4
  $region2: #{spatial_uv_transformer.1} parent=0 // loop_pre_header
    _
  $region3: #{spatial_uv_transformer.1} parent=0 // loop_header
    %s9 = sphi 0, %s13
    %p10 = scmp.ge.s32.totalorder %s9, 4
    %s16 = sphi 0, %s28
    %s17 = sphi 0, %s24
    %s18 = sphi 0, %s16
    %s19 = sphi 0, %s17
    %s20 = sphi 0, %s18
    %s21 = sphi 0, %s19
    %s31 = sphi 0, %s33
    %s34 = sphi 0, %s31
    %s35 = sphi 0, %s34
    %s51 = sphi 0, %s35
    %s57 = sphi 0, %s59
    %s60 = sphi 0, %s57
    %s61 = sphi 0, %s60
    %s77 = sphi 0, %s61
    %s83 = sphi 0, %s85
    %s86 = sphi 0, %s83
    %s87 = sphi 0, %s86
    %s103 = sphi 0, %s87
    %s111 = sphi 0, %s113
    %s114 = sphi 0, %s111
    %s115 = sphi 0, %s114
    %s131 = sphi 0, %s115
  $region4: #{spatial_uv_transformer.1} parent=0 // loop_header_branch
    %12 = sbr.rel (%p10) target = $region8
  $region5: #{spatial_uv_transformer.1} parent=0 // loop_body
    %s14 = ssub.s32 %s9, 1
    %s15 = ssub.s32 %s9, 2
    %s22 = sadd.s32 1, %s17
    %p23 = scmp.ge.s32.totalorder %s22, 1
    %s24 = scalar_select %p23, 0, %s22
    %s25 = sadd.s32 1, %s16
    %s26 = scalar_select %p23, %s25, %s16
    %p27 = scmp.ge.s32.totalorder %s26, 2
    %s28 = scalar_select %p27, 0, %s26
    %s29 = ssub.s32 %s16, %s28
    %p30 = scmp.eq.s32.totalorder %s29, 0
    %s32 = sadd.s32 %s31, 1
    %s33 = scalar_select %p30, %s31, %s32
    %p36 = pneg %p30
    %p37 = scmp.eq.s32.totalorder %s9, 1
    %p38 = por %p36, %p37
    %p39 = scmp.ne.s32.totalorder %s31, %s34
    %p40 = scmp.eq.s32.totalorder %s9, 0
    %p41 = por %p39, %p40
    %p42 = scmp.ne.s32.totalorder %s31, %s34
    %p43 = scmp.eq.s32.totalorder %s14, 1
    %p44 = por %p42, %p43
    %p45 = scmp.ne.s32.totalorder %s34, %s35
    %p46 = scmp.eq.s32.totalorder %s14, 0
    %p47 = por %p45, %p46
    %p48 = scmp.ne.s32.totalorder %s34, %s35
    %p49 = scmp.eq.s32.totalorder %s15, 1
    %p50 = por %p48, %p49
    %p52 = scmp.ne.s32.totalorder %s35, %s51
    %p53 = scmp.eq.s32.totalorder %s15, 0
    %p54 = por %p52, %p53
    %s55 = ssub.s32 %s17, %s24
    %p56 = scmp.eq.s32.totalorder %s55, 0
    %s58 = sadd.s32 %s57, 1
    %s59 = scalar_select %p56, %s57, %s58
    %p62 = pneg %p56
    %p63 = scmp.eq.s32.totalorder %s9, 1
    %p64 = por %p62, %p63
    %p65 = scmp.ne.s32.totalorder %s57, %s60
    %p66 = scmp.eq.s32.totalorder %s9, 0
    %p67 = por %p65, %p66
    %p68 = scmp.ne.s32.totalorder %s57, %s60
    %p69 = scmp.eq.s32.totalorder %s14, 1
    %p70 = por %p68, %p69
    %p71 = scmp.ne.s32.totalorder %s60, %s61
    %p72 = scmp.eq.s32.totalorder %s14, 0
    %p73 = por %p71, %p72
    %p74 = scmp.ne.s32.totalorder %s60, %s61
    %p75 = scmp.eq.s32.totalorder %s15, 1
    %p76 = por %p74, %p75
    %p78 = scmp.ne.s32.totalorder %s61, %s77
    %p79 = scmp.eq.s32.totalorder %s15, 0
    %p80 = por %p78, %p79
    %s81 = ssub.s32 %s16, %s28
    %p82 = scmp.eq.s32.totalorder %s81, 0
    %s84 = sadd.s32 %s83, 1
    %s85 = scalar_select %p82, %s83, %s84
    %p88 = pneg %p82
    %p89 = scmp.eq.s32.totalorder %s9, 1
    %p90 = por %p88, %p89
    %p91 = scmp.ne.s32.totalorder %s83, %s86
    %p92 = scmp.eq.s32.totalorder %s9, 0
    %p93 = por %p91, %p92
    %p94 = scmp.ne.s32.totalorder %s83, %s86
    %p95 = scmp.eq.s32.totalorder %s14, 1
    %p96 = por %p94, %p95
    %p97 = scmp.ne.s32.totalorder %s86, %s87
    %p98 = scmp.eq.s32.totalorder %s14, 0
    %p99 = por %p97, %p98
    %p100 = scmp.ne.s32.totalorder %s86, %s87
    %p101 = scmp.eq.s32.totalorder %s15, 1
    %p102 = por %p100, %p101
    %p104 = scmp.ne.s32.totalorder %s87, %s103
    %p105 = scmp.eq.s32.totalorder %s15, 0
    %p106 = por %p104, %p105
    %s107 = ssub.s32 %s16, %s28
    %s108 = ssub.s32 %s17, %s24
    %s109 = sor.u32 %s107, %s108
    %p110 = scmp.eq.s32.totalorder %s109, 0
    %s112 = sadd.s32 %s111, 1
    %s113 = scalar_select %p110, %s111, %s112
    %p116 = pneg %p110
    %p117 = scmp.eq.s32.totalorder %s9, 1
    %p118 = por %p116, %p117
    %p119 = scmp.ne.s32.totalorder %s111, %s114
    %p120 = scmp.eq.s32.totalorder %s9, 0
    %p121 = por %p119, %p120
    %p122 = scmp.ne.s32.totalorder %s111, %s114
    %p123 = scmp.eq.s32.totalorder %s14, 1
    %p124 = por %p122, %p123
    %p125 = scmp.ne.s32.totalorder %s114, %s115
    %p126 = scmp.eq.s32.totalorder %s14, 0
    %p127 = por %p125, %p126
    %p128 = scmp.ne.s32.totalorder %s114, %s115
    %p129 = scmp.eq.s32.totalorder %s15, 1
    %p130 = por %p128, %p129
    %p132 = scmp.ne.s32.totalorder %s115, %s131
    %p133 = scmp.eq.s32.totalorder %s15, 0
    %p134 = por %p132, %p133
    %p135 = scmp.le.s32.totalorder 1, %s9
    %p136 = scmp.lt.s32.totalorder %s9, 3
    %p137 = pnand %p135, %p136
    %p138 = pneg %p137
    // Predicated region
    $region9: #{spatial_uv_transformer.1} parent=5 // pred_check
      _
    $region10: #{spatial_uv_transformer.1} parent=5 // pred_check_branch
      %140 = sbr.rel (%p137) target = $region12
    $region11: #{spatial_uv_transformer.1} parent=5 // pred_region
      %s141 = ssub.s32 %s9, 1
      // Predicated region
      $region13: #{spatial_uv_transformer.1} parent=11 // pred_check
        %p142 = pneg %p73
      $region14: #{spatial_uv_transformer.1} parent=11 // pred_check_branch
        %144 = sbr.rel (%p142) target = $region16
      $region15: #{spatial_uv_transformer.1} parent=11 // pred_region
        %s145 = smul.u32 2, %s19
        %p146 = scmp.lt.s32.totalorder %s145, 1
        %s147 = scalar_select %p146, %s145, 1
        %s148 = smul.addr %s147, 8
        %s149 = scalar_lea.vmem %s1, %s148
        %s150 = smul.u32 2, %s19
      $region16: #{spatial_uv_transformer.1} parent=11 // pred_fallthru
        _
    $region12: #{spatial_uv_transformer.1} parent=5 // pred_fallthru
      _
    %p151 = scmp.lt.s32.totalorder %s9, 2
    // Predicated region
    $region17: #{spatial_uv_transformer.1} parent=5 // pred_check
      %p152 = pneg %p151
    $region18: #{spatial_uv_transformer.1} parent=5 // pred_check_branch
      %154 = sbr.rel (%p152) target = $region20
    $region19: #{spatial_uv_transformer.1} parent=5 // pred_region
      // Predicated region
      $region21: #{spatial_uv_transformer.1} parent=19 // pred_check
        %p155 = pneg %p41
      $region22: #{spatial_uv_transformer.1} parent=19 // pred_check_branch
        %157 = sbr.rel (%p155) target = $region24
      $region23: #{spatial_uv_transformer.1} parent=19 // pred_region
        %p158 = scmp.lt.s32.totalorder %s16, 1
        %s159 = scalar_select %p158, %s16, 1
        %s160 = smul.addr %s159, 2
        %s161 = scalar_lea.vmem %s0, %s160
      $region24: #{spatial_uv_transformer.1} parent=19 // pred_fallthru
        _
      // Predicated region
      $region25: #{spatial_uv_transformer.1} parent=19 // pred_check
        %p162 = pneg %p93
      $region26: #{spatial_uv_transformer.1} parent=19 // pred_check_branch
        %164 = sbr.rel (%p162) target = $region28
      $region27: #{spatial_uv_transformer.1} parent=19 // pred_region
        %p165 = scmp.lt.s32.totalorder %s16, 1
        %s166 = scalar_select %p165, %s16, 1
        %s167 = smul.addr %s166, 8
        %s168 = smul.addr %s167, 4
        %s169 = scalar_lea.vmem %s2, %s168
      $region28: #{spatial_uv_transformer.1} parent=19 // pred_fallthru
        _
    $region20: #{spatial_uv_transformer.1} parent=5 // pred_fallthru
      _
    %p170 = scmp.le.s32.totalorder 1, %s9
    %p171 = scmp.lt.s32.totalorder %s9, 3
    %p172 = pnand %p170, %p171
    %p173 = pneg %p172
    // Predicated region
    $region29: #{spatial_uv_transformer.1} parent=5 // pred_check
      _
    $region30: #{spatial_uv_transformer.1} parent=5 // pred_check_branch
      %175 = sbr.rel (%p172) target = $region32
    $region31: #{spatial_uv_transformer.1} parent=5 // pred_region
      %s176 = ssub.s32 %s9, 1
      %p177 = scmp.lt.s32.totalorder %s18, 1
      %s178 = scalar_select %p177, %s18, 1
      %s179 = smul.addr %s178, 2
      %s180 = scalar_lea.vmem %s0, %s179
      %p181 = pneg %p47
      %p182 = pneg %p44
      %s183 = smul.u32 2, %s19
      %p184 = scmp.lt.s32.totalorder %s183, 1
      %s185 = scalar_select %p184, %s183, 1
      %s186 = smul.addr %s185, 8
      %s187 = scalar_lea.vmem %s1, %s186
      %p188 = pneg %p73
      %p189 = pneg %p70
      %p190 = scmp.lt.s32.totalorder %s18, 1
      %s191 = scalar_select %p190, %s18, 1
      %s192 = smul.addr %s191, 8
      %s193 = smul.addr %s192, 4
      %s194 = scalar_lea.vmem %s2, %s193
      %p195 = pneg %p99
      %p196 = pneg %p96
      %p197 = pneg %p127
      %p198 = pneg %p124
      %s199 = smul.u32 2, %s19
      %p200 = scmp.lt.s32.totalorder %s18, 1
      %s201 = scalar_select %p200, %s18, 1
      %p202 = scmp.lt.s32.totalorder %s199, 1
      %s203 = scalar_select %p202, %s199, 1
      %s204 = smul.addr %s201, 2
      %s205 = sadd.s32 %s203, %s204
      %s206 = smul.addr %s205, 4
      %s207 = scalar_lea.vmem %s3, %s206
      %p208 = scmp.lt.s32.totalorder %s18, 1
      %s209 = scalar_select %p208, %s18, 1
      %s210 = smul.addr %s209, 2
      %s211 = scalar_lea.vmem %s0, %s210
      %s212 = smul.u32 2, %s19
      %p213 = scmp.lt.s32.totalorder %s212, 1
      %s214 = scalar_select %p213, %s212, 1
      %s215 = smul.addr %s214, 8
      %s216 = scalar_lea.vmem %s1, %s215
      %s217 = smul.u32 2, %s19
      %p218 = scmp.lt.s32.totalorder %s18, 1
      %s219 = scalar_select %p218, %s18, 1
      %s220 = smul.addr %s219, 8
      %s221 = smul.addr %s220, 4
      %s222 = scalar_lea.vmem %s2, %s221
      %s223 = smul.u32 2, %s19
      %p224 = scmp.lt.s32.totalorder %s18, 1
      %s225 = scalar_select %p224, %s18, 1
      %p226 = scmp.lt.s32.totalorder %s223, 1
      %s227 = scalar_select %p226, %s223, 1
      %s228 = smul.addr %s225, 2
      %s229 = sadd.s32 %s227, %s228
      %s230 = smul.addr %s229, 4
      %s231 = scalar_lea.vmem %s3, %s230
      %s232 = smul.u32 2, %s19
      %v234 = vld [vmem:[%s211] sm:$0x3]
      %v235 = vld [vmem:[%s216] sm:$0xff]
      %v236 = vld [vmem:[%s216 + $0x8] sm:$0xff]
      %v237 = vld [vmem:[%s216 + $0x10] sm:$0xff]
      %v238 = vld [vmem:[%s216 + $0x18] sm:$0xff]
      %v239 = vld [vmem:[%s216 + $0x20] sm:$0xff]
      %v240 = vld [vmem:[%s216 + $0x28] sm:$0xff]
      %v241 = vld [vmem:[%s216 + $0x30] sm:$0xff]
      %v242 = vld [vmem:[%s216 + $0x38] sm:$0xff]
      %v243 = vld [vmem:[%s216 + $0x40] sm:$0xff]
      %v244 = vld [vmem:[%s216 + $0x48] sm:$0xff]
      %v245 = vld [vmem:[%s216 + $0x50] sm:$0xff]
      %v246 = vld [vmem:[%s216 + $0x58] sm:$0xff]
      %v247 = vld [vmem:[%s216 + $0x60] sm:$0xff]
      %v248 = vld [vmem:[%s216 + $0x68] sm:$0xff]
      %v249 = vld [vmem:[%s216 + $0x70] sm:$0xff]
      %v250 = vld [vmem:[%s216 + $0x78] sm:$0xff]
      %vm251 = vcmask 523264
      %v253 = vsel %vm251, %v234, 0
      %255 = vmatprep.subr.mxu0 0.0
      %256 = vmatpush1.msra.mxu0 0.0
      %257 = vmatprep.subr.mxu0 0.0
      %258 = vmatpush1.msra.mxu0 0.0
      %259 = vmatprep.subr.mxu0 0.0
      %260 = vmatpush1.msra.mxu0 0.0
      %261 = vmatprep.subr.mxu0 0.0
      %262 = vmatpush1.msra.mxu0 0.0
      %263 = vmatprep.subr.mxu0 0.0
      %264 = vmatpush1.msra.mxu0 0.0
      %265 = vmatprep.subr.mxu0 0.0
      %266 = vmatpush1.msra.mxu0 0.0
      %267 = vmatprep.subr.mxu0 0.0
      %268 = vmatpush1.msra.mxu0 0.0
      %269 = vmatprep.subr.mxu0 0.0
      %270 = vmatpush1.msra.mxu0 0.0
      %271 = vmatprep.subr.mxu0 %v250
      %272 = vmatpush1.msra.mxu0 %v249
      %273 = vmatprep.subr.mxu0 %v248
      %274 = vmatpush1.msra.mxu0 %v247
      %275 = vmatprep.subr.mxu0 %v246
      %276 = vmatpush1.msra.mxu0 %v245
      %277 = vmatprep.subr.mxu0 %v244
      %278 = vmatpush1.msra.mxu0 %v243
      %279 = vmatprep.subr.mxu0 %v242
      %280 = vmatpush1.msra.mxu0 %v241
      %281 = vmatprep.subr.mxu0 %v240
      %282 = vmatpush1.msra.mxu0 %v239
      %283 = vmatprep.subr.mxu0 %v238
      %284 = vmatpush1.msra.mxu0 %v237
      %285 = vmatprep.subr.mxu0 %v236
      %286 = vmatpush1.msra.mxu0 %v235
      %287 = vmatprep.subr.mxu0 0.0
      %288 = vmatpush2.msra.mxu0 0.0
      %289 = vmatprep.subr.mxu0 0.0
      %290 = vmatpush2.msra.mxu0 0.0
      %291 = vmatprep.subr.mxu0 0.0
      %292 = vmatpush2.msra.mxu0 0.0
      %293 = vmatprep.subr.mxu0 0.0
      %294 = vmatpush2.msra.mxu0 0.0
      %295 = vmatprep.subr.mxu0 0.0
      %296 = vmatpush2.msra.mxu0 0.0
      %297 = vmatprep.subr.mxu0 0.0
      %298 = vmatpush2.msra.mxu0 0.0
      %299 = vmatprep.subr.mxu0 0.0
      %300 = vmatpush2.msra.mxu0 0.0
      %301 = vmatprep.subr.mxu0 0.0
      %302 = vmatpush2.msra.mxu0 0.0
      %303 = vmatprep.subr.mxu0 0.0
      %304 = vmatpush2.msra.mxu0 0.0
      %305 = vmatprep.subr.mxu0 0.0
      %306 = vmatpush2.msra.mxu0 0.0
      %307 = vmatprep.subr.mxu0 0.0
      %308 = vmatpush2.msra.mxu0 0.0
      %309 = vmatprep.subr.mxu0 0.0
      %310 = vmatpush2.msra.mxu0 0.0
      %311 = vmatprep.subr.mxu0 0.0
      %312 = vmatpush2.msra.mxu0 0.0
      %313 = vmatprep.subr.mxu0 0.0
      %314 = vmatpush2.msra.mxu0 0.0
      %315 = vmatprep.subr.mxu0 0.0
      %316 = vmatpush2.msra.mxu0 0.0
      %317 = vmatprep.subr.mxu0 0.0
      %318 = vmatpush2.msra.mxu0 0.0
      %319 = vmatprep.mubr.f32.mxu0 0.0
      %320 = vmatmul.mubr.f32.gmra.mxu0 %v253
      %v321 = vpop.f32.mrf.mxu0
      %v322 = vadd.f32 0.0, %v321
      %v323 = vpop.f32.mrf.mxu0
      %v324 = vadd.f32 0.0, %v323
      %325 = vdwg.mxu0
      %v326 = vadd.f32 %v322, 1.0
      %v327 = vadd.f32 %v324, 1.0
      %v328 = vmul.f32 %v326, 7.5
      %v329 = vmul.f32 %v327, 7.5
      %v330 = vfloor.f32 %v328
      %v331 = vfloor.f32 %v329
      %v332 = vsub.f32 %v328, %v330
      %v333 = vsub.f32 %v329, %v331
      %v334 = vsub.f32 1.0, %v332
      %v335 = vsub.f32 1.0, %v333
      %v336 = vcvt.f32.s32.to.zero.pseudo %v330
      %v337 = vcvt.f32.s32.to.zero.pseudo %v331
      %v338 = vlaneseq
      %v339 = vshrl.u32 %v338, 7
      %v340 = vadd.s32 %v339, 8
      %v341 = vlaneseq
      %v342 = vshrl.u32 %v341, 7
      %v343 = vsub.s32 0, %v342
      %v344 = vrot.slane %v336, %v343
      %v345 = vlaneseq
      %v346 = vshrl.u32 %v345, 7
      %v347 = vsub.s32 0, %v346
      %v348 = vrot.slane %v337, %v347
      %vm349 = vcmp.eq.s32.totalorder %v339, %v344
      %vm350 = vcmp.eq.s32.totalorder %v339, %v348
      %vm351 = vcmp.eq.s32.totalorder %v340, %v344
      %vm352 = vcmp.eq.s32.totalorder %v340, %v348
      %v353 = vlaneseq
      %v354 = vshrl.u32 %v353, 7
      %v355 = vsub.s32 0, %v354
      %v356 = vrot.slane %v334, %v355
      %v357 = vlaneseq
      %v358 = vshrl.u32 %v357, 7
      %v359 = vsub.s32 0, %v358
      %v360 = vrot.slane %v335, %v359
      %v361 = vsel %vm349, %v356, 0.0
      %v362 = vsel %vm350, %v360, 0.0
      %v363 = vsel %vm351, %v356, 0.0
      %v364 = vsel %vm352, %v360, 0.0
      %v365 = vadd.s32 %v336, 1
      %v366 = vadd.s32 %v337, 1
      %v367 = vlaneseq
      %v368 = vshrl.u32 %v367, 7
      %v369 = vsub.s32 0, %v368
      %v370 = vrot.slane %v365, %v369
      %v371 = vlaneseq
      %v372 = vshrl.u32 %v371, 7
      %v373 = vsub.s32 0, %v372
      %v374 = vrot.slane %v366, %v373
      %vm375 = vcmp.eq.s32.totalorder %v339, %v370
      %vm376 = vcmp.eq.s32.totalorder %v339, %v374
      %vm377 = vcmp.eq.s32.totalorder %v340, %v370
      %vm378 = vcmp.eq.s32.totalorder %v340, %v374
      %v379 = vlaneseq
      %v380 = vshrl.u32 %v379, 7
      %v381 = vsub.s32 0, %v380
      %v382 = vrot.slane %v332, %v381
      %v383 = vlaneseq
      %v384 = vshrl.u32 %v383, 7
      %v385 = vsub.s32 0, %v384
      %v386 = vrot.slane %v333, %v385
      %v387 = vsel %vm375, %v382, 0.0
      %v388 = vsel %vm376, %v386, 0.0
      %v389 = vsel %vm377, %v382, 0.0
      %v390 = vsel %vm378, %v386, 0.0
      %v391 = vadd.f32 %v361, %v387
      %v392 = vadd.f32 %v362, %v388
      %v393 = vadd.f32 %v363, %v389
      %v394 = vadd.f32 %v364, %v390
      %v395 = vlaneseq
      %v396 = vshrl.u32 %v395, 7
      %v397 = vsub.s32 1, %v396
      %v398 = vrot.slane %v336, %v397
      %v399 = vlaneseq
      %v400 = vshrl.u32 %v399, 7
      %v401 = vsub.s32 1, %v400
      %v402 = vrot.slane %v337, %v401
      %vm403 = vcmp.eq.s32.totalorder %v339, %v398
      %vm404 = vcmp.eq.s32.totalorder %v339, %v402
      %vm405 = vcmp.eq.s32.totalorder %v340, %v398
      %vm406 = vcmp.eq.s32.totalorder %v340, %v402
      %v407 = vlaneseq
      %v408 = vshrl.u32 %v407, 7
      %v409 = vsub.s32 1, %v408
      %v410 = vrot.slane %v334, %v409
      %v411 = vlaneseq
      %v412 = vshrl.u32 %v411, 7
      %v413 = vsub.s32 1, %v412
      %v414 = vrot.slane %v335, %v413
      %v415 = vsel %vm403, %v410, 0.0
      %v416 = vsel %vm404, %v414, 0.0
      %v417 = vsel %vm405, %v410, 0.0
      %v418 = vsel %vm406, %v414, 0.0
      %v419 = vlaneseq
      %v420 = vshrl.u32 %v419, 7
      %v421 = vsub.s32 1, %v420
      %v422 = vrot.slane %v365, %v421
      %v423 = vlaneseq
      %v424 = vshrl.u32 %v423, 7
      %v425 = vsub.s32 1, %v424
      %v426 = vrot.slane %v366, %v425
      %vm427 = vcmp.eq.s32.totalorder %v339, %v422
      %vm428 = vcmp.eq.s32.totalorder %v339, %v426
      %vm429 = vcmp.eq.s32.totalorder %v340, %v422
      %vm430 = vcmp.eq.s32.totalorder %v340, %v426
      %v431 = vlaneseq
      %v432 = vshrl.u32 %v431, 7
      %v433 = vsub.s32 1, %v432
      %v434 = vrot.slane %v332, %v433
      %v435 = vlaneseq
      %v436 = vshrl.u32 %v435, 7
      %v437 = vsub.s32 1, %v436
      %v438 = vrot.slane %v333, %v437
      %v439 = vsel %vm427, %v434, 0.0
      %v440 = vsel %vm428, %v438, 0.0
      %v441 = vsel %vm429, %v434, 0.0
      %v442 = vsel %vm430, %v438, 0.0
      %v443 = vadd.f32 %v415, %v439
      %v444 = vadd.f32 %v416, %v440
      %v445 = vadd.f32 %v417, %v441
      %v446 = vadd.f32 %v418, %v442
      %v447 = vld [vmem:[%s222] sm:$0xf]
      %v448 = vld [vmem:[%s222 + $0x4] sm:$0xf]
      %v449 = vld [vmem:[%s222 + $0x8] sm:$0xf]
      %v450 = vld [vmem:[%s222 + $0xc] sm:$0xf]
      %v451 = vld [vmem:[%s222 + $0x10] sm:$0xf]
      %v452 = vld [vmem:[%s222 + $0x14] sm:$0xf]
      %v453 = vld [vmem:[%s222 + $0x18] sm:$0xf]
      %v454 = vld [vmem:[%s222 + $0x1c] sm:$0xf]
      %v455 = vpack.c.bf16 %v393, %v391
      %v456 = vpack.c.bf16 %v394, %v392
      %v465 = vunpack.c.l.b16 %v447
      %v466 = vunpack.c.l.b16 %v448
      %v467 = vunpack.c.l.b16 %v449
      %v468 = vunpack.c.l.b16 %v450
      %v469 = vunpack.c.l.b16 %v451
      %v470 = vunpack.c.l.b16 %v452
      %v471 = vunpack.c.l.b16 %v453
      %v472 = vunpack.c.l.b16 %v454
      %v473 = vpack.c.b16 %v466, %v465
      %v474 = vpack.c.b16 %v468, %v467
      %v475 = vpack.c.b16 %v470, %v469
      %v476 = vpack.c.b16 %v472, %v471
      %vm477 = vcmask 130048
      %v479 = vsel %vm477, %v473, 0
      %v482 = vsel %vm477, %v474, 0
      %v485 = vsel %vm477, %v475, 0
      %v488 = vsel %vm477, %v476, 0
      %490 = vmatprep.subr.bf16.mxu0 0
      %491 = vmatpush1.bf16.msra.mxu0 0
      %492 = vmatprep.subr.bf16.mxu0 0
      %493 = vmatpush1.bf16.msra.mxu0 0
      %494 = vmatprep.subr.bf16.mxu0 0
      %495 = vmatpush1.bf16.msra.mxu0 0
      %496 = vmatprep.subr.bf16.mxu0 0
      %497 = vmatpush1.bf16.msra.mxu0 0
      %498 = vmatprep.subr.bf16.mxu0 0
      %499 = vmatpush1.bf16.msra.mxu0 0
      %500 = vmatprep.subr.bf16.mxu0 0
      %501 = vmatpush1.bf16.msra.mxu0 0
      %502 = vmatprep.subr.bf16.mxu0 0
      %503 = vmatpush1.bf16.msra.mxu0 0
      %504 = vmatprep.subr.bf16.mxu0 %v456
      %505 = vmatpush1.bf16.msra.mxu0 %v455
      %506 = vmatprep.subr.bf16.mxu0 0
      %507 = vmatpush2.bf16.msra.mxu0 0
      %508 = vmatprep.subr.bf16.mxu0 0
      %509 = vmatpush2.bf16.msra.mxu0 0
      %510 = vmatprep.subr.bf16.mxu0 0
      %511 = vmatpush2.bf16.msra.mxu0 0
      %512 = vmatprep.subr.bf16.mxu0 0
      %513 = vmatpush2.bf16.msra.mxu0 0
      %514 = vmatprep.subr.bf16.mxu0 0
      %515 = vmatpush2.bf16.msra.mxu0 0
      %516 = vmatprep.subr.bf16.mxu0 0
      %517 = vmatpush2.bf16.msra.mxu0 0
      %518 = vmatprep.subr.bf16.mxu0 0
      %519 = vmatpush2.bf16.msra.mxu0 0
      %520 = vmatprep.subr.bf16.mxu0 0
      %521 = vmatpush2.bf16.msra.mxu0 0
      %522 = vmatprep.mubr.bf16.mxu0 0
      %523 = vmatmul.mubr.bf16.gmra.mxu0 %v479
      %v524 = vpop.f32.mrf.mxu0
      %v525 = vadd.f32 0.0, %v524
      %v526 = vpop.f32.mrf.mxu0
      %v527 = vadd.f32 0.0, %v526
      %v528 = vpop.f32.mrf.mxu0
      %v529 = vadd.f32 0.0, %v528
      %v530 = vpop.f32.mrf.mxu0
      %v531 = vadd.f32 0.0, %v530
      %532 = vmatprep.mubr.bf16.mxu0 0
      %533 = vmatmul.mubr.bf16.gmra.mxu0 %v482
      %v534 = vpop.f32.mrf.mxu0
      %v535 = vadd.f32 0.0, %v534
      %v536 = vpop.f32.mrf.mxu0
      %v537 = vadd.f32 0.0, %v536
      %v538 = vpop.f32.mrf.mxu0
      %v539 = vadd.f32 0.0, %v538
      %v540 = vpop.f32.mrf.mxu0
      %v541 = vadd.f32 0.0, %v540
      %542 = vmatprep.mubr.bf16.mxu0 0
      %543 = vmatmul.mubr.bf16.gmra.mxu0 %v485
      %v544 = vpop.f32.mrf.mxu0
      %v545 = vadd.f32 0.0, %v544
      %v546 = vpop.f32.mrf.mxu0
      %v547 = vadd.f32 0.0, %v546
      %v548 = vpop.f32.mrf.mxu0
      %v549 = vadd.f32 0.0, %v548
      %v550 = vpop.f32.mrf.mxu0
      %v551 = vadd.f32 0.0, %v550
      %552 = vmatprep.mubr.bf16.mxu0 0
      %553 = vmatmul.mubr.bf16.gmra.mxu0 %v488
      %v554 = vpop.f32.mrf.mxu0
      %v555 = vadd.f32 0.0, %v554
      %v556 = vpop.f32.mrf.mxu0
      %v557 = vadd.f32 0.0, %v556
      %v558 = vpop.f32.mrf.mxu0
      %v559 = vadd.f32 0.0, %v558
      %v560 = vpop.f32.mrf.mxu0
      %v561 = vadd.f32 0.0, %v560
      %562 = vdwg.mxu0
      %v563 = vmul.f32 %v525, %v443
      %v564 = vmul.f32 %v527, %v444
      %v565 = vmul.f32 %v529, %v445
      %v566 = vmul.f32 %v531, %v446
      %v567 = vmul.f32 %v535, %v443
      %v568 = vmul.f32 %v537, %v444
      %v569 = vmul.f32 %v539, %v445
      %v570 = vmul.f32 %v541, %v446
      %v571 = vmul.f32 %v545, %v443
      %v572 = vmul.f32 %v547, %v444
      %v573 = vmul.f32 %v549, %v445
      %v574 = vmul.f32 %v551, %v446
      %v575 = vmul.f32 %v555, %v443
      %v576 = vmul.f32 %v557, %v444
      %v577 = vmul.f32 %v559, %v445
      %v578 = vmul.f32 %v561, %v446
      %v579 = vadd.f32 %v563, %v565
      %v580 = vrot.slane %v579, 4
      %v581 = vadd.f32 %v579, %v580
      %v582 = vrot.slane %v581, 2
      %v583 = vadd.f32 %v581, %v582
      %v584 = vrot.slane %v583, 1
      %v585 = vadd.f32 %v583, %v584
      %v586 = vadd.f32 %v564, %v566
      %v587 = vrot.slane %v586, 4
      %v588 = vadd.f32 %v586, %v587
      %v589 = vrot.slane %v588, 2
      %v590 = vadd.f32 %v588, %v589
      %v591 = vrot.slane %v590, 1
      %v592 = vadd.f32 %v590, %v591
      %v593 = vadd.f32 %v567, %v569
      %v594 = vrot.slane %v593, 4
      %v595 = vadd.f32 %v593, %v594
      %v596 = vrot.slane %v595, 2
      %v597 = vadd.f32 %v595, %v596
      %v598 = vrot.slane %v597, 1
      %v599 = vadd.f32 %v597, %v598
      %v600 = vadd.f32 %v568, %v570
      %v601 = vrot.slane %v600, 4
      %v602 = vadd.f32 %v600, %v601
      %v603 = vrot.slane %v602, 2
      %v604 = vadd.f32 %v602, %v603
      %v605 = vrot.slane %v604, 1
      %v606 = vadd.f32 %v604, %v605
      %v607 = vadd.f32 %v571, %v573
      %v608 = vrot.slane %v607, 4
      %v609 = vadd.f32 %v607, %v608
      %v610 = vrot.slane %v609, 2
      %v611 = vadd.f32 %v609, %v610
      %v612 = vrot.slane %v611, 1
      %v613 = vadd.f32 %v611, %v612
      %v614 = vadd.f32 %v572, %v574
      %v615 = vrot.slane %v614, 4
      %v616 = vadd.f32 %v614, %v615
      %v617 = vrot.slane %v616, 2
      %v618 = vadd.f32 %v616, %v617
      %v619 = vrot.slane %v618, 1
      %v620 = vadd.f32 %v618, %v619
      %v621 = vadd.f32 %v575, %v577
      %v622 = vrot.slane %v621, 4
      %v623 = vadd.f32 %v621, %v622
      %v624 = vrot.slane %v623, 2
      %v625 = vadd.f32 %v623, %v624
      %v626 = vrot.slane %v625, 1
      %v627 = vadd.f32 %v625, %v626
      %v628 = vadd.f32 %v576, %v578
      %v629 = vrot.slane %v628, 4
      %v630 = vadd.f32 %v628, %v629
      %v631 = vrot.slane %v630, 2
      %v632 = vadd.f32 %v630, %v631
      %v633 = vrot.slane %v632, 1
      %v634 = vadd.f32 %v632, %v633
      %v643 = vcombine.low %v585, %v592
      %v644 = vcombine.low %v599, %v606
      %v645 = vcombine.low %v613, %v620
      %v646 = vcombine.low %v627, %v634
      %v647 = vrot.slane %v644, 7
      %vm648 = vcmask 1041409
      %v649 = vsel %vm648, %v647, %v643
      %vm650 = vcmask 1045509
      %v651 = vsel %vm650, %v647, %v649
      %v652 = vrot.slane %v645, 6
      %vm653 = vcmask 1042434
      %v654 = vsel %vm653, %v652, %v651
      %vm655 = vcmask 1046534
      %v656 = vsel %vm655, %v652, %v654
      %v657 = vrot.slane %v646, 5
      %vm658 = vcmask 1043459
      %v659 = vsel %vm658, %v657, %v656
      %vm660 = vcmask 1047559
      %v661 = vsel %vm660, %v657, %v659
      %663 = vst [vmem:[%s231] sm:$0xff] %v661
      %s664 = smul.u32 2, %s19
      %p665 = scmp.lt.s32.totalorder %s18, 1
      %s666 = scalar_select %p665, %s18, 1
      %p667 = scmp.lt.s32.totalorder %s664, 1
      %s668 = scalar_select %p667, %s664, 1
      %s669 = smul.addr %s666, 2
      %s670 = sadd.s32 %s668, %s669
      %s671 = smul.addr %s670, 4
      %s672 = scalar_lea.vmem %s3, %s671
      // Predicated region
      $region33: #{spatial_uv_transformer.1} parent=31 // pred_check
        %p673 = pneg %p124
      $region34: #{spatial_uv_transformer.1} parent=31 // pred_check_branch
        %675 = sbr.rel (%p673) target = $region36
      $region35: #{spatial_uv_transformer.1} parent=31 // pred_region
        %s676 = smul.u32 2, %s19
      $region36: #{spatial_uv_transformer.1} parent=31 // pred_fallthru
        _
    $region32: #{spatial_uv_transformer.1} parent=5 // pred_fallthru
      _
    %p677 = scmp.le.s32.totalorder 2, %s9
    // Predicated region
    $region37: #{spatial_uv_transformer.1} parent=5 // pred_check
      %p678 = pneg %p677
    $region38: #{spatial_uv_transformer.1} parent=5 // pred_check_branch
      %680 = sbr.rel (%p678) target = $region40
    $region39: #{spatial_uv_transformer.1} parent=5 // pred_region
      %s681 = ssub.s32 %s9, 2
      // Predicated region
      $region41: #{spatial_uv_transformer.1} parent=39 // pred_check
        %p682 = pneg %p130
      $region42: #{spatial_uv_transformer.1} parent=39 // pred_check_branch
        %684 = sbr.rel (%p682) target = $region44
      $region43: #{spatial_uv_transformer.1} parent=39 // pred_region
        %s685 = smul.u32 2, %s21
        %p686 = scmp.lt.s32.totalorder %s20, 1
        %s687 = scalar_select %p686, %s20, 1
        %p688 = scmp.lt.s32.totalorder %s685, 1
        %s689 = scalar_select %p688, %s685, 1
        %s690 = smul.addr %s687, 2
        %s691 = sadd.s32 %s689, %s690
        %s692 = smul.addr %s691, 4
        %s693 = scalar_lea.vmem %s3, %s692
      $region44: #{spatial_uv_transformer.1} parent=39 // pred_fallthru
        _
    $region40: #{spatial_uv_transformer.1} parent=5 // pred_fallthru
      _
  $region6: #{spatial_uv_transformer.1} parent=0 // loop_footer
    %s13 = sadd.s32 1, %s9
  $region7: #{spatial_uv_transformer.1} parent=0 // loop_footer_branch
    %8 = sbr.rel target = $region3
  $region8: #{spatial_uv_transformer.1} parent=0 // loop_exit
    _

</llo_original>
